<compile_context>
chip_gen: v5e
topology: v5e:2x2
jax: 0.10.0
libtpu: 0.0.40
codegen_flags: <defaults>
</compile_context>

<pallas_src>
import math

import jax
import jax.numpy as jnp
from jax.experimental import pallas as pl
from jax.experimental.pallas import tpu as pltpu

_LANES = 128
_SUBLANES = 8


def _time_aware_pos_ids_kernel(params_ref, pos_ref, time_ref, o_ref):
    # params_ref: (3,) float32 in SMEM -> [pos_a, time_a, pi_b]
    pos_a = params_ref[0]
    time_a = params_ref[1]
    pi_b = params_ref[2]

    pos = pos_ref[...].astype(jnp.float32)
    tim = time_ref[...].astype(jnp.float32)

    o_ref[...] = (pos_a * pos + time_a * tim + pi_b).astype(o_ref.dtype)


def get_time_aware_position_ids(position_ids, time_ids, pos_a, time_a, pi_b,
                                *, tile_rows=2048):
    """out = pos_a * position_ids + time_a * time_ids + pi_b (any shape)."""
    position_ids, time_ids = jnp.broadcast_arrays(position_ids, time_ids)
    orig_shape = position_ids.shape
    n = int(math.prod(orig_shape)) if orig_shape else 1

    # Repack into a lane-dense (rows_padded, 128) slab, rows_padded % TM == 0.
    rows = pl.cdiv(n, _LANES)
    rows = _SUBLANES * pl.cdiv(rows, _SUBLANES)
    tm = max(_SUBLANES, (min(tile_rows, rows) // _SUBLANES) * _SUBLANES)
    rows_padded = tm * pl.cdiv(rows, tm)
    n_padded = rows_padded * _LANES

    def _pack(x):
        flat = x.reshape(-1)
        flat = jnp.pad(flat, (0, n_padded - n))
        return flat.reshape(rows_padded, _LANES)

    pos2d = _pack(position_ids)
    time2d = _pack(time_ids)

    # Fuse the three scalar parameters into a single SMEM-resident array.
    params = jnp.stack([
        jnp.asarray(pos_a, jnp.float32),
        jnp.asarray(time_a, jnp.float32),
        jnp.asarray(pi_b, jnp.float32),
    ])

    grid = (rows_padded // tm,)
    bytes_accessed = 4 * 3 * n_padded + 3 * 4  # 2 inputs + 1 output + params

    out2d = pl.pallas_call(
        _time_aware_pos_ids_kernel,
        out_shape=jax.ShapeDtypeStruct((rows_padded, _LANES), jnp.float32),
        grid=grid,
        in_specs=[
            pl.BlockSpec(memory_space=pltpu.MemorySpace.SMEM),   # fused params
            pl.BlockSpec((tm, _LANES), lambda i: (i, 0)),        # position_ids
            pl.BlockSpec((tm, _LANES), lambda i: (i, 0)),        # time_ids
        ],
        out_specs=pl.BlockSpec((tm, _LANES), lambda i: (i, 0)),
        compiler_params=pltpu.CompilerParams(
            dimension_semantics=("parallel",)),
        cost_estimate=pl.CostEstimate(
            flops=4 * n_padded,
            transcendentals=0,
            bytes_accessed=bytes_accessed),
    )(params, pos2d, time2d)

    return out2d.reshape(-1)[:n].reshape(orig_shape)


def _reference(position_ids, time_ids, pos_a, time_a, pi_b):
    return (pos_a * position_ids.astype(jnp.float32)
            + time_a * time_ids.astype(jnp.float32)
            + pi_b)


if __name__ == "__main__":
    # Small shapes consistent with the module: batch=2, seq=8.
    batch, seq = 2, 8

    key = jax.random.PRNGKey(0)
    k_time, k_pa, k_ta, k_pb = jax.random.split(key, 4)

    # position_ids like BERT: 0..seq-1 per row (int); time_ids: float timestamps.
    position_ids = jnp.broadcast_to(
        jnp.arange(seq, dtype=jnp.int32)[None, :], (batch, seq))
    time_ids = jax.random.uniform(k_time, (batch, seq), jnp.float32,
                                  minval=0.0, maxval=100.0)

    # Learnable scalar parameters (init'd as 1.0 / 1.0 / 0.0 in the module;
    # perturb deterministically so the test is non-trivial).
    pos_a = 1.0 + 0.1 * jax.random.normal(k_pa, (), jnp.float32)
    time_a = 1.0 + 0.1 * jax.random.normal(k_ta, (), jnp.float32)
    pi_b = 0.1 * jax.random.normal(k_pb, (), jnp.float32)

    out = get_time_aware_position_ids(position_ids, time_ids,
                                      pos_a, time_a, pi_b)
    out = jax.block_until_ready(out)

    ref = _reference(position_ids, time_ids, pos_a, time_a, pi_b)
    assert out.shape == (batch, seq)
    assert jnp.allclose(out, ref, atol=1e-5, rtol=1e-5), "mismatch vs reference"

    print("KERNEL_OK")
</pallas_src>

<mosaic_0001>
module attributes {stable_mosaic.version = 11 : i64} {
  func.func @_time_aware_pos_ids_kernel(%arg0: i32, %arg1: memref<3xf32, #tpu.memory_space<smem>>, %arg2: memref<8x128xi32, #tpu.memory_space<vmem>>, %arg3: memref<8x128xf32, #tpu.memory_space<vmem>>, %arg4: memref<8x128xf32, #tpu.memory_space<vmem>>) attributes {dimension_semantics = [#tpu.dimension_semantics<parallel>], iteration_bounds = array<i64: 1>, scalar_prefetch = 0 : i64, scratch_operands = 0 : i64, tpu.core_type = #tpu.core_type<tc>, window_params = [{transform_indices = @transform_0, window_bounds = array<i64: 3>}, {transform_indices = @transform_1, window_bounds = array<i64: 8, 128>}, {transform_indices = @transform_2, window_bounds = array<i64: 8, 128>}, {transform_indices = @transform_3, window_bounds = array<i64: 8, 128>}]} {
    %c0 = arith.constant 0 : index
    %0 = memref.load %arg1[%c0] : memref<3xf32, #tpu.memory_space<smem>>
    %c1 = arith.constant 1 : index
    %1 = memref.load %arg1[%c1] : memref<3xf32, #tpu.memory_space<smem>>
    %c2 = arith.constant 2 : index
    %2 = memref.load %arg1[%c2] : memref<3xf32, #tpu.memory_space<smem>>
    %c0_0 = arith.constant 0 : index
    %c0_1 = arith.constant 0 : index
    %3 = vector.load %arg2[%c0_0, %c0_1] : memref<8x128xi32, #tpu.memory_space<vmem>>, vector<8x128xi32>
    %4 = arith.sitofp %3 : vector<8x128xi32> to vector<8x128xf32>
    %c0_2 = arith.constant 0 : index
    %c0_3 = arith.constant 0 : index
    %5 = vector.load %arg3[%c0_2, %c0_3] : memref<8x128xf32, #tpu.memory_space<vmem>>, vector<8x128xf32>
    %6 = vector.broadcast %0 : f32 to vector<8x128xf32>
    %7 = arith.mulf %6, %4 : vector<8x128xf32>
    %8 = vector.broadcast %1 : f32 to vector<8x128xf32>
    %9 = arith.mulf %8, %5 : vector<8x128xf32>
    %10 = arith.addf %7, %9 : vector<8x128xf32>
    %11 = vector.broadcast %2 : f32 to vector<8x128xf32>
    %12 = arith.addf %10, %11 : vector<8x128xf32>
    %c0_4 = arith.constant 0 : index
    %c0_5 = arith.constant 0 : index
    %13 = vector.load %arg4[%c0_4, %c0_5] : memref<8x128xf32, #tpu.memory_space<vmem>>, vector<8x128xf32>
    tpu.vector_store %arg4[%c0_4, %c0_5], %12 {strides = array<i32>} : memref<8x128xf32, #tpu.memory_space<vmem>>, vector<8x128xf32>,
    return
  }
  func.func @transform_0(%arg0: i32) -> i32 {
    %c0_i32 = arith.constant 0 : i32
    %c0_i32_0 = arith.constant 0 : i32
    return %c0_i32 : i32
  }
  func.func @transform_1(%arg0: i32) -> (i32, i32) {
    %c0_i32 = arith.constant 0 : i32
    %c0_i32_0 = arith.constant 0 : i32
    return %arg0, %c0_i32 : i32, i32
  }
  func.func @transform_2(%arg0: i32) -> (i32, i32) {
    %c0_i32 = arith.constant 0 : i32
    %c0_i32_0 = arith.constant 0 : i32
    return %arg0, %c0_i32 : i32, i32
  }
  func.func @transform_3(%arg0: i32) -> (i32, i32) {
    %c0_i32 = arith.constant 0 : i32
    %c0_i32_0 = arith.constant 0 : i32
    return %arg0, %c0_i32 : i32, i32
  }
}

</mosaic_0001>

<llo_original>
// kernel: tpu_custom_call.1
$region0: #{tpu_custom_call.1}
  #allocation0 [shape = 'u32[]', space=smem, size = 0x4, offset = 0x4, fixed_abs, tag = 'smem constant byte address 0x4 - core index']
  #allocation1 [shape = 'u32[72,128]{1,0:T(1,128)}', space=vmem, size = 0x9000, scoped, tag = 'internal scratch']
  %s0 = inlined_call_operand.hbm [shape: f32[3], index: 0, kind: input, shape index: {}]
  %s1 = inlined_call_operand.hbm [shape: s32[8,128], index: 1, kind: input, shape index: {}]
  %s2 = inlined_call_operand.hbm [shape: f32[8,128], index: 2, kind: input, shape index: {}]
  %s3 = inlined_call_operand.hbm [shape: f32[8,128], index: 3, kind: output, shape index: {}]
  %s4 = sld [smem:[#allocation0]]
  $region34: #{tpu_custom_call.1} parent=0
    _
  %s6 = ssub.s32 1, %s4
  %s7 = scalar_select 0, %s6, %s4
  $region1: #{tpu_custom_call.1} parent=0
    #allocation2 [shape = 'u8[512]{0}', space=smem, size = 0x200, scoped, tag = 'input window, operand 0, single buffered']
    #allocation3 [shape = 's32[1]{0}', space=sflag, size = 0x4, scoped, tag = 'scoped memory for tpu_custom_call.1']
    #allocation4 [shape = 's32[1]{0}', space=sflag, size = 0x4, scoped, tag = 'scoped memory for tpu_custom_call.1']
    #allocation5 [shape = 's32[1]{0}', space=sflag, size = 0x4, scoped, tag = 'scoped memory for tpu_custom_call.1']
    #allocation6 [shape = 'u8[4096]{0}', space=vmem, size = 0x1000, scoped, tag = 'input window, operand 1, single buffered']
    #allocation7 [shape = 'u8[4096]{0}', space=vmem, size = 0x1000, scoped, tag = 'input window, operand 2, single buffered']
    #allocation8 [shape = 's32[1]{0}', space=sflag, size = 0x4, scoped, tag = 'scoped memory for tpu_custom_call.1']
    #allocation9 [shape = 'u8[4096]{0}', space=vmem, size = 0x1000, scoped, tag = 'output window, operand 0, single buffered']
    %8 = vsyncpa [#allocation5], 0
    %9 = vsyncpa [#allocation3], 0
    %10 = vsyncpa [#allocation8], 0
    %11 = vsyncpa [#allocation4], 0
    // Predicated region
    $region2: #{tpu_custom_call.1} parent=1 // pred_check
      _
    $region3: #{tpu_custom_call.1} parent=1 // pred_check_branch
      %13 = sbr.rel (0) target = $region5
    $region4: #{tpu_custom_call.1} parent=1 // pred_region
      %15 = vsyncadd [#allocation5], 0
      %s17 = sshll.u32 %s0, 4
      %s18 = int_to_ptr.hbm [resolvable:$true] %s17
      %20 = dma.hbm_to_smem %s18, 16, [#allocation2], [#allocation5]
    $region5: #{tpu_custom_call.1} parent=1 // pred_fallthru
      _
    // Predicated region
    $region6: #{tpu_custom_call.1} parent=1 // pred_check
      _
    $region7: #{tpu_custom_call.1} parent=1 // pred_check_branch
      %22 = sbr.rel (0) target = $region9
    $region8: #{tpu_custom_call.1} parent=1 // pred_region
      %24 = vsyncadd [#allocation3], 0
      %s26 = sshll.u32 %s1, 4
      %s27 = int_to_ptr.hbm [resolvable:$true] %s26
      %s28 = sshll.u32 [#allocation6], 4
      %s29 = int_to_ptr.vmem [resolvable:$true] %s28
      %31 = dma.hbm_to_vmem [thread:$0]  %s27, 128, %s29, [#allocation3]
    $region9: #{tpu_custom_call.1} parent=1 // pred_fallthru
      _
    // Predicated region
    $region10: #{tpu_custom_call.1} parent=1 // pred_check
      _
    $region11: #{tpu_custom_call.1} parent=1 // pred_check_branch
      %33 = sbr.rel (0) target = $region13
    $region12: #{tpu_custom_call.1} parent=1 // pred_region
      %35 = vsyncadd [#allocation8], 0
      %s37 = sshll.u32 %s2, 4
      %s38 = int_to_ptr.hbm [resolvable:$true] %s37
      %s39 = sshll.u32 [#allocation7], 4
      %s40 = int_to_ptr.vmem [resolvable:$true] %s39
      %42 = dma.hbm_to_vmem [thread:$0]  %s38, 128, %s40, [#allocation8]
    $region13: #{tpu_custom_call.1} parent=1 // pred_fallthru
      _
    // Predicated region
    $region14: #{tpu_custom_call.1} parent=1 // pred_check
      _
    $region15: #{tpu_custom_call.1} parent=1 // pred_check_branch
      %44 = sbr.rel (0) target = $region17
    $region16: #{tpu_custom_call.1} parent=1 // pred_region
      %46 = dma.done [#allocation5], 16
    $region17: #{tpu_custom_call.1} parent=1 // pred_fallthru
      _
    // Predicated region
    $region18: #{tpu_custom_call.1} parent=1 // pred_check
      _
    $region19: #{tpu_custom_call.1} parent=1 // pred_check_branch
      %48 = sbr.rel (0) target = $region21
    $region20: #{tpu_custom_call.1} parent=1 // pred_region
      %50 = dma.done [#allocation3], 128
    $region21: #{tpu_custom_call.1} parent=1 // pred_fallthru
      _
    // Predicated region
    $region22: #{tpu_custom_call.1} parent=1 // pred_check
      _
    $region23: #{tpu_custom_call.1} parent=1 // pred_check_branch
      %52 = sbr.rel (0) target = $region25
    $region24: #{tpu_custom_call.1} parent=1 // pred_region
      %54 = dma.done [#allocation8], 128
    $region25: #{tpu_custom_call.1} parent=1 // pred_fallthru
      _
    %55 = sfence
    %s56 = sld [smem:[#allocation2]]
    %s57 = sld [smem:[#allocation2 + $0x1]]
    %s58 = sld [smem:[#allocation2 + $0x2]]
    %v59 = vld [vmem:[#allocation6] sm:$0xff]
    %v60 = vcvt.s32.f32 %v59
    %v61 = vld [vmem:[#allocation7] sm:$0xff]
    %v62 = vstv %s56
    %v63 = vmul.f32 %v62, %v60
    %v64 = vstv %s57
    %v65 = vmul.f32 %v64, %v61
    %v66 = vadd.f32 %v63, %v65
    %v67 = vstv %s58
    %v68 = vadd.f32 %v66, %v67
    %69 = vst [vmem:[#allocation9] sm:$0xff] %v68
    // Predicated region
    $region26: #{tpu_custom_call.1} parent=1 // pred_check
      _
    $region27: #{tpu_custom_call.1} parent=1 // pred_check_branch
      %71 = sbr.rel (0) target = $region29
    $region28: #{tpu_custom_call.1} parent=1 // pred_region
      %73 = vsyncadd [#allocation4], 0
      %s75 = sshll.u32 [#allocation9], 4
      %s76 = int_to_ptr.vmem [resolvable:$true] %s75
      %s77 = sshll.u32 %s3, 4
      %s78 = int_to_ptr.hbm [resolvable:$true] %s77
      %80 = dma.vmem_to_hbm [thread:$0]  %s76, 128, %s78, [#allocation4]
    $region29: #{tpu_custom_call.1} parent=1 // pred_fallthru
      _
    // Predicated region
    $region30: #{tpu_custom_call.1} parent=1 // pred_check
      _
    $region31: #{tpu_custom_call.1} parent=1 // pred_check_branch
      %82 = sbr.rel (0) target = $region33
    $region32: #{tpu_custom_call.1} parent=1 // pred_region
      %84 = dma.done [#allocation4], 128
    $region33: #{tpu_custom_call.1} parent=1 // pred_fallthru
      _
    %85 = vsyncpa [#allocation3], 1
    %86 = vsyncpa [#allocation8], 1
    %87 = vsyncpa [#allocation4], 1
    %88 = vsyncpa [#allocation5], 1

</llo_original>
